<compile_context>
chip_gen: v7x
topology: tpu7x:2x2x1
jax: 0.10.0
libtpu: 0.0.40
codegen_flags: <defaults>
</compile_context>

<pallas_src>
import jax
import jax.numpy as jnp
from jax import lax
from jax.experimental import pallas as pl
from jax.experimental.pallas import tpu as pltpu


def _rnn_kernel(x_ref, h0_ref, wih_ref, whh_ref, b_ref, out_ref):
    """Whole RNN forward in one invocation. All refs are full arrays in VMEM.

    x_ref   : (B, S, I)   batch_first input
    h0_ref  : (1, B, H)   initial hidden state
    wih_ref : (I, H)      W_ih^T (pre-transposed in the wrapper)
    whh_ref : (H, H)      W_hh^T (pre-transposed in the wrapper)
    b_ref   : (1, H)      b_ih + b_hh (fused in the wrapper)
    out_ref : (B, S, H)   batch_first RNN_out
    """
    B, S, I = x_ref.shape
    H = whh_ref.shape[0]

    # --- Hoisted input projection: no serial dependence, one MXU matmul. ---
    x_all = x_ref[...].reshape(B * S, I)                         # (B*S, I)
    xw = jnp.dot(x_all, wih_ref[...],
                 preferred_element_type=jnp.float32) + b_ref[...]  # (B*S, H)
    xw = xw.reshape(B, S, H)                                     # (B, S, H)

    whh = whh_ref[...]                                           # (H, H)
    h = h0_ref[0]                                                # (B, H), lives in vregs

    # --- Recurrence: fully unrolled static time loop, hidden in registers. ---
    for t in range(S):
        h = jnp.tanh(xw[:, t, :]
                     + jnp.dot(h, whh, preferred_element_type=jnp.float32))
        out_ref[:, t, :] = h.astype(out_ref.dtype)


@jax.jit
def controller_forward(k_read, hidden, w_ih, w_hh, b_ih, b_hh):
    """Pallas equivalent of controller.forward(k_read, hidden).

    k_read : (B, S, I)  with I = k_size + 1        (batch_first input)
    hidden : (1, B, H)
    w_ih   : (H, I)   w_hh : (H, H)   b_ih, b_hh : (H,)   (PyTorch param shapes)
    returns (RNN_out (B, S, H), hidden (1, B, H))
    """
    B, S, I = k_read.shape
    H = hidden.shape[-1]

    x = k_read.astype(jnp.float32)                               # (B, S, I), no transpose
    wih_t = jnp.transpose(w_ih).astype(jnp.float32)              # (I, H)
    whh_t = jnp.transpose(w_hh).astype(jnp.float32)              # (H, H)
    bias = (b_ih + b_hh).astype(jnp.float32).reshape(1, H)       # (1, H)
    h0 = hidden.astype(jnp.float32)                              # (1, B, H)

    vmem_specs = [pl.BlockSpec(memory_space=pltpu.MemorySpace.VMEM)
                  for _ in range(5)]

    rnn_out = pl.pallas_call(
        _rnn_kernel,
        out_shape=jax.ShapeDtypeStruct((B, S, H), jnp.float32),
        in_specs=vmem_specs,
        out_specs=pl.BlockSpec(memory_space=pltpu.MemorySpace.VMEM),
    )(x, h0, wih_t, whh_t, bias)

    # Final hidden state of a 1-layer unidirectional RNN == last output step.
    hidden_out = rnn_out[:, S - 1, :][None]                      # (1, B, H)
    return rnn_out, hidden_out


def _rnn_reference(k_read, hidden, w_ih, w_hh, b_ih, b_hh):
    """Pure-JAX reference matching torch.nn.RNN (tanh, 1 layer, batch_first)."""
    def step(h, x_t):
        h_new = jnp.tanh(x_t @ w_ih.T + b_ih + h @ w_hh.T + b_hh)
        return h_new, h_new
    x_tm = jnp.transpose(k_read, (1, 0, 2))
    h_last, outs = lax.scan(step, hidden[0], x_tm)
    return jnp.transpose(outs, (1, 0, 2)), h_last[None]


if __name__ == "__main__":
    # Small shapes consistent with the module: k_size=7 -> input=8, hidden=32.
    B, S, K, H = 2, 8, 7, 32
    I = K + 1

    key = jax.random.PRNGKey(0)
    k0, k1, k2, k3, k4, k5 = jax.random.split(key, 6)

    # Deterministic "parameters" (PyTorch shapes: W_ih (H,I), W_hh (H,H), biases (H,))
    scale = 1.0 / jnp.sqrt(H)
    w_ih = jax.random.uniform(k0, (H, I), jnp.float32, -scale, scale)
    w_hh = jax.random.uniform(k1, (H, H), jnp.float32, -scale, scale)
    b_ih = jax.random.uniform(k2, (H,), jnp.float32, -scale, scale)
    b_hh = jax.random.uniform(k3, (H,), jnp.float32, -scale, scale)

    # Inputs: k_read (B, S, k_size+1), hidden (1, B, H)
    k_read = jax.random.normal(k4, (B, S, I), jnp.float32)
    hidden = jax.random.normal(k5, (1, B, H), jnp.float32)

    rnn_out, h_out = controller_forward(k_read, hidden, w_ih, w_hh, b_ih, b_hh)
    rnn_out = jax.block_until_ready(rnn_out)
    h_out = jax.block_until_ready(h_out)

    ref_out, ref_h = _rnn_reference(k_read, hidden, w_ih, w_hh, b_ih, b_hh)
    assert rnn_out.shape == (B, S, H) and h_out.shape == (1, B, H)
    assert jnp.allclose(rnn_out, ref_out, atol=1e-5, rtol=1e-5)
    assert jnp.allclose(h_out, ref_h, atol=1e-5, rtol=1e-5)

    print("KERNEL_OK")
</pallas_src>

<mosaic_0001>
module attributes {stable_mosaic.version = 11 : i64} {
  func.func @_rnn_kernel(%arg0: memref<2x8x8xf32, #tpu.memory_space<vmem>>, %arg1: memref<1x2x32xf32, #tpu.memory_space<vmem>>, %arg2: memref<8x32xf32, #tpu.memory_space<vmem>>, %arg3: memref<32x32xf32, #tpu.memory_space<vmem>>, %arg4: memref<1x32xf32, #tpu.memory_space<vmem>>, %arg5: memref<2x8x32xf32, #tpu.memory_space<vmem>>) attributes {dimension_semantics = [], scalar_prefetch = 0 : i64, scratch_operands = 0 : i64, tpu.core_type = #tpu.core_type<tc>} {
    %c0 = arith.constant 0 : index
    %c0_0 = arith.constant 0 : index
    %c0_1 = arith.constant 0 : index
    %0 = vector.load %arg0[%c0, %c0_0, %c0_1] : memref<2x8x8xf32, #tpu.memory_space<vmem>>, vector<2x8x8xf32>
    %1 = vector.shape_cast %0 : vector<2x8x8xf32> to vector<16x8xf32>
    %c0_2 = arith.constant 0 : index
    %c0_3 = arith.constant 0 : index
    %2 = vector.load %arg2[%c0_2, %c0_3] : memref<8x32xf32, #tpu.memory_space<vmem>>, vector<8x32xf32>
    %cst = arith.constant dense<0.000000e+00> : vector<16x32xf32>
    %3 = tpu.matmul %1, %2, %cst {dimension_numbers = #tpu.dot_dimension_numbers<[1], [0], [0], [1], [0, 0, 1, 1], [], []>} : vector<16x8xf32>, vector<8x32xf32>, vector<16x32xf32> -> vector<16x32xf32>
    %c0_4 = arith.constant 0 : index
    %c0_5 = arith.constant 0 : index
    %4 = vector.load %arg4[%c0_4, %c0_5] : memref<1x32xf32, #tpu.memory_space<vmem>>, vector<1x32xf32>
    %5 = vector.broadcast %4 : vector<1x32xf32> to vector<16x32xf32>
    %6 = arith.addf %3, %5 : vector<16x32xf32>
    %7 = vector.shape_cast %6 : vector<16x32xf32> to vector<2x8x32xf32>
    %c0_6 = arith.constant 0 : index
    %c0_7 = arith.constant 0 : index
    %8 = vector.load %arg3[%c0_6, %c0_7] : memref<32x32xf32, #tpu.memory_space<vmem>>, vector<32x32xf32>
    %c0_8 = arith.constant 0 : index
    %c0_9 = arith.constant 0 : index
    %c0_10 = arith.constant 0 : index
    %9 = vector.load %arg1[%c0_8, %c0_9, %c0_10] : memref<1x2x32xf32, #tpu.memory_space<vmem>>, vector<1x2x32xf32>
    %10 = vector.shape_cast %9 : vector<1x2x32xf32> to vector<2x32xf32>
    %11 = vector.extract_strided_slice %7 {offsets = [0, 0, 0], sizes = [2, 1, 32], strides = [1, 1, 1]} : vector<2x8x32xf32> to vector<2x1x32xf32>
    %12 = vector.shape_cast %11 : vector<2x1x32xf32> to vector<2x32xf32>
    %cst_11 = arith.constant dense<0.000000e+00> : vector<2x32xf32>
    %13 = tpu.matmul %10, %8, %cst_11 {dimension_numbers = #tpu.dot_dimension_numbers<[1], [0], [0], [1], [0, 0, 1, 1], [], []>} : vector<2x32xf32>, vector<32x32xf32>, vector<2x32xf32> -> vector<2x32xf32>
    %14 = arith.addf %12, %13 : vector<2x32xf32>
    %15 = math.tanh %14 : vector<2x32xf32>
    %c0_12 = arith.constant 0 : index
    %c0_13 = arith.constant 0 : index
    %c0_14 = arith.constant 0 : index
    %16 = vector.load %arg5[%c0_12, %c0_13, %c0_14] : memref<2x8x32xf32, #tpu.memory_space<vmem>>, vector<2x1x32xf32>
    %17 = vector.shape_cast %16 : vector<2x1x32xf32> to vector<2x32xf32>
    %18 = vector.shape_cast %15 : vector<2x32xf32> to vector<2x1x32xf32>
    tpu.vector_store %arg5[%c0_12, %c0_13, %c0_14], %18 {strides = array<i32>} : memref<2x8x32xf32, #tpu.memory_space<vmem>>, vector<2x1x32xf32>,
    %19 = vector.extract_strided_slice %7 {offsets = [0, 1, 0], sizes = [2, 1, 32], strides = [1, 1, 1]} : vector<2x8x32xf32> to vector<2x1x32xf32>
    %20 = vector.shape_cast %19 : vector<2x1x32xf32> to vector<2x32xf32>
    %cst_15 = arith.constant dense<0.000000e+00> : vector<2x32xf32>
    %21 = tpu.matmul %15, %8, %cst_15 {dimension_numbers = #tpu.dot_dimension_numbers<[1], [0], [0], [1], [0, 0, 1, 1], [], []>} : vector<2x32xf32>, vector<32x32xf32>, vector<2x32xf32> -> vector<2x32xf32>
    %22 = arith.addf %20, %21 : vector<2x32xf32>
    %23 = math.tanh %22 : vector<2x32xf32>
    %c0_16 = arith.constant 0 : index
    %c1 = arith.constant 1 : index
    %c0_17 = arith.constant 0 : index
    %24 = vector.load %arg5[%c0_16, %c1, %c0_17] : memref<2x8x32xf32, #tpu.memory_space<vmem>>, vector<2x1x32xf32>
    %25 = vector.shape_cast %24 : vector<2x1x32xf32> to vector<2x32xf32>
    %26 = vector.shape_cast %23 : vector<2x32xf32> to vector<2x1x32xf32>
    tpu.vector_store %arg5[%c0_16, %c1, %c0_17], %26 {strides = array<i32>} : memref<2x8x32xf32, #tpu.memory_space<vmem>>, vector<2x1x32xf32>,
    %27 = vector.extract_strided_slice %7 {offsets = [0, 2, 0], sizes = [2, 1, 32], strides = [1, 1, 1]} : vector<2x8x32xf32> to vector<2x1x32xf32>
    %28 = vector.shape_cast %27 : vector<2x1x32xf32> to vector<2x32xf32>
    %cst_18 = arith.constant dense<0.000000e+00> : vector<2x32xf32>
    %29 = tpu.matmul %23, %8, %cst_18 {dimension_numbers = #tpu.dot_dimension_numbers<[1], [0], [0], [1], [0, 0, 1, 1], [], []>} : vector<2x32xf32>, vector<32x32xf32>, vector<2x32xf32> -> vector<2x32xf32>
    %30 = arith.addf %28, %29 : vector<2x32xf32>
    %31 = math.tanh %30 : vector<2x32xf32>
    %c0_19 = arith.constant 0 : index
    %c2 = arith.constant 2 : index
    %c0_20 = arith.constant 0 : index
    %32 = vector.load %arg5[%c0_19, %c2, %c0_20] : memref<2x8x32xf32, #tpu.memory_space<vmem>>, vector<2x1x32xf32>
    %33 = vector.shape_cast %32 : vector<2x1x32xf32> to vector<2x32xf32>
    %34 = vector.shape_cast %31 : vector<2x32xf32> to vector<2x1x32xf32>
    tpu.vector_store %arg5[%c0_19, %c2, %c0_20], %34 {strides = array<i32>} : memref<2x8x32xf32, #tpu.memory_space<vmem>>, vector<2x1x32xf32>,
    %35 = vector.extract_strided_slice %7 {offsets = [0, 3, 0], sizes = [2, 1, 32], strides = [1, 1, 1]} : vector<2x8x32xf32> to vector<2x1x32xf32>
    %36 = vector.shape_cast %35 : vector<2x1x32xf32> to vector<2x32xf32>
    %cst_21 = arith.constant dense<0.000000e+00> : vector<2x32xf32>
    %37 = tpu.matmul %31, %8, %cst_21 {dimension_numbers = #tpu.dot_dimension_numbers<[1], [0], [0], [1], [0, 0, 1, 1], [], []>} : vector<2x32xf32>, vector<32x32xf32>, vector<2x32xf32> -> vector<2x32xf32>
    %38 = arith.addf %36, %37 : vector<2x32xf32>
    %39 = math.tanh %38 : vector<2x32xf32>
    %c0_22 = arith.constant 0 : index
    %c3 = arith.constant 3 : index
    %c0_23 = arith.constant 0 : index
    %40 = vector.load %arg5[%c0_22, %c3, %c0_23] : memref<2x8x32xf32, #tpu.memory_space<vmem>>, vector<2x1x32xf32>
    %41 = vector.shape_cast %40 : vector<2x1x32xf32> to vector<2x32xf32>
    %42 = vector.shape_cast %39 : vector<2x32xf32> to vector<2x1x32xf32>
    tpu.vector_store %arg5[%c0_22, %c3, %c0_23], %42 {strides = array<i32>} : memref<2x8x32xf32, #tpu.memory_space<vmem>>, vector<2x1x32xf32>,
    %43 = vector.extract_strided_slice %7 {offsets = [0, 4, 0], sizes = [2, 1, 32], strides = [1, 1, 1]} : vector<2x8x32xf32> to vector<2x1x32xf32>
    %44 = vector.shape_cast %43 : vector<2x1x32xf32> to vector<2x32xf32>
    %cst_24 = arith.constant dense<0.000000e+00> : vector<2x32xf32>
    %45 = tpu.matmul %39, %8, %cst_24 {dimension_numbers = #tpu.dot_dimension_numbers<[1], [0], [0], [1], [0, 0, 1, 1], [], []>} : vector<2x32xf32>, vector<32x32xf32>, vector<2x32xf32> -> vector<2x32xf32>
    %46 = arith.addf %44, %45 : vector<2x32xf32>
    %47 = math.tanh %46 : vector<2x32xf32>
    %c0_25 = arith.constant 0 : index
    %c4 = arith.constant 4 : index
    %c0_26 = arith.constant 0 : index
    %48 = vector.load %arg5[%c0_25, %c4, %c0_26] : memref<2x8x32xf32, #tpu.memory_space<vmem>>, vector<2x1x32xf32>
    %49 = vector.shape_cast %48 : vector<2x1x32xf32> to vector<2x32xf32>
    %50 = vector.shape_cast %47 : vector<2x32xf32> to vector<2x1x32xf32>
    tpu.vector_store %arg5[%c0_25, %c4, %c0_26], %50 {strides = array<i32>} : memref<2x8x32xf32, #tpu.memory_space<vmem>>, vector<2x1x32xf32>,
    %51 = vector.extract_strided_slice %7 {offsets = [0, 5, 0], sizes = [2, 1, 32], strides = [1, 1, 1]} : vector<2x8x32xf32> to vector<2x1x32xf32>
    %52 = vector.shape_cast %51 : vector<2x1x32xf32> to vector<2x32xf32>
    %cst_27 = arith.constant dense<0.000000e+00> : vector<2x32xf32>
    %53 = tpu.matmul %47, %8, %cst_27 {dimension_numbers = #tpu.dot_dimension_numbers<[1], [0], [0], [1], [0, 0, 1, 1], [], []>} : vector<2x32xf32>, vector<32x32xf32>, vector<2x32xf32> -> vector<2x32xf32>
    %54 = arith.addf %52, %53 : vector<2x32xf32>
    %55 = math.tanh %54 : vector<2x32xf32>
    %c0_28 = arith.constant 0 : index
    %c5 = arith.constant 5 : index
    %c0_29 = arith.constant 0 : index
    %56 = vector.load %arg5[%c0_28, %c5, %c0_29] : memref<2x8x32xf32, #tpu.memory_space<vmem>>, vector<2x1x32xf32>
    %57 = vector.shape_cast %56 : vector<2x1x32xf32> to vector<2x32xf32>
    %58 = vector.shape_cast %55 : vector<2x32xf32> to vector<2x1x32xf32>
    tpu.vector_store %arg5[%c0_28, %c5, %c0_29], %58 {strides = array<i32>} : memref<2x8x32xf32, #tpu.memory_space<vmem>>, vector<2x1x32xf32>,
    %59 = vector.extract_strided_slice %7 {offsets = [0, 6, 0], sizes = [2, 1, 32], strides = [1, 1, 1]} : vector<2x8x32xf32> to vector<2x1x32xf32>
    %60 = vector.shape_cast %59 : vector<2x1x32xf32> to vector<2x32xf32>
    %cst_30 = arith.constant dense<0.000000e+00> : vector<2x32xf32>
    %61 = tpu.matmul %55, %8, %cst_30 {dimension_numbers = #tpu.dot_dimension_numbers<[1], [0], [0], [1], [0, 0, 1, 1], [], []>} : vector<2x32xf32>, vector<32x32xf32>, vector<2x32xf32> -> vector<2x32xf32>
    %62 = arith.addf %60, %61 : vector<2x32xf32>
    %63 = math.tanh %62 : vector<2x32xf32>
    %c0_31 = arith.constant 0 : index
    %c6 = arith.constant 6 : index
    %c0_32 = arith.constant 0 : index
    %64 = vector.load %arg5[%c0_31, %c6, %c0_32] : memref<2x8x32xf32, #tpu.memory_space<vmem>>, vector<2x1x32xf32>
    %65 = vector.shape_cast %64 : vector<2x1x32xf32> to vector<2x32xf32>
    %66 = vector.shape_cast %63 : vector<2x32xf32> to vector<2x1x32xf32>
    tpu.vector_store %arg5[%c0_31, %c6, %c0_32], %66 {strides = array<i32>} : memref<2x8x32xf32, #tpu.memory_space<vmem>>, vector<2x1x32xf32>,
    %67 = vector.extract_strided_slice %7 {offsets = [0, 7, 0], sizes = [2, 1, 32], strides = [1, 1, 1]} : vector<2x8x32xf32> to vector<2x1x32xf32>
    %68 = vector.shape_cast %67 : vector<2x1x32xf32> to vector<2x32xf32>
    %cst_33 = arith.constant dense<0.000000e+00> : vector<2x32xf32>
    %69 = tpu.matmul %63, %8, %cst_33 {dimension_numbers = #tpu.dot_dimension_numbers<[1], [0], [0], [1], [0, 0, 1, 1], [], []>} : vector<2x32xf32>, vector<32x32xf32>, vector<2x32xf32> -> vector<2x32xf32>
    %70 = arith.addf %68, %69 : vector<2x32xf32>
    %71 = math.tanh %70 : vector<2x32xf32>
    %c0_34 = arith.constant 0 : index
    %c7 = arith.constant 7 : index
    %c0_35 = arith.constant 0 : index
    %72 = vector.load %arg5[%c0_34, %c7, %c0_35] : memref<2x8x32xf32, #tpu.memory_space<vmem>>, vector<2x1x32xf32>
    %73 = vector.shape_cast %72 : vector<2x1x32xf32> to vector<2x32xf32>
    %74 = vector.shape_cast %71 : vector<2x32xf32> to vector<2x1x32xf32>
    tpu.vector_store %arg5[%c0_34, %c7, %c0_35], %74 {strides = array<i32>} : memref<2x8x32xf32, #tpu.memory_space<vmem>>, vector<2x1x32xf32>,
    return
  }
}

</mosaic_0001>

<llo_original>
// kernel: controller_forward.1
$region0: #{controller_forward.1}
  #allocation0 [shape = 'u32[]', space=smem, size = 0x4, offset = 0x4, fixed_abs, tag = 'smem constant byte address 0x4 - core index']
  #allocation1 [shape = 'u32[144,128]{1,0:T(1,128)}', space=vmem, size = 0x12000, scoped, tag = 'internal scratch']
  %s0 = inlined_call_operand.vmem [shape: f32[2,8,8], index: 0, kind: input, shape index: {}]
  %s1 = inlined_call_operand.vmem [shape: f32[1,2,32], index: 1, kind: input, shape index: {}]
  %s2 = inlined_call_operand.vmem [shape: f32[8,32], index: 2, kind: input, shape index: {}]
  %s3 = inlined_call_operand.vmem [shape: f32[32,32], index: 3, kind: input, shape index: {}]
  %s4 = inlined_call_operand.vmem [shape: f32[1,32], index: 4, kind: input, shape index: {}]
  %s5 = inlined_call_operand.vmem [shape: f32[2,8,32], index: 5, kind: output, shape index: {}]
  %s6 = sld [smem:[#allocation0]]
  $region30: #{controller_forward.1} parent=0
    _
  %s8 = ssub.s32 1, %s6
  %s9 = scalar_select 0, %s8, %s6
  // Predicated region
  $region2: #{controller_forward.1} parent=0 // pred_check
    _
  $region3: #{controller_forward.1} parent=0 // pred_check_branch
    %11 = sbr.rel (0) target = $region5
  $region4: #{controller_forward.1} parent=0 // pred_region
    _
  $region5: #{controller_forward.1} parent=0 // pred_fallthru
    _
  // Predicated region
  $region6: #{controller_forward.1} parent=0 // pred_check
    _
  $region7: #{controller_forward.1} parent=0 // pred_check_branch
    %13 = sbr.rel (0) target = $region9
  $region8: #{controller_forward.1} parent=0 // pred_region
    _
  $region9: #{controller_forward.1} parent=0 // pred_fallthru
    _
  // Predicated region
  $region10: #{controller_forward.1} parent=0 // pred_check
    _
  $region11: #{controller_forward.1} parent=0 // pred_check_branch
    %15 = sbr.rel (0) target = $region13
  $region12: #{controller_forward.1} parent=0 // pred_region
    _
  $region13: #{controller_forward.1} parent=0 // pred_fallthru
    _
  // Predicated region
  $region14: #{controller_forward.1} parent=0 // pred_check
    _
  $region15: #{controller_forward.1} parent=0 // pred_check_branch
    %17 = sbr.rel (0) target = $region17
  $region16: #{controller_forward.1} parent=0 // pred_region
    _
  $region17: #{controller_forward.1} parent=0 // pred_fallthru
    _
  // Predicated region
  $region18: #{controller_forward.1} parent=0 // pred_check
    _
  $region19: #{controller_forward.1} parent=0 // pred_check_branch
    %19 = sbr.rel (0) target = $region21
  $region20: #{controller_forward.1} parent=0 // pred_region
    _
  $region21: #{controller_forward.1} parent=0 // pred_fallthru
    _
  %v20 = vld [vmem:[%s0] sm:$0xff]
  %v21 = vld [vmem:[%s0 + $0x8] sm:$0xff]
  %v22 = vld [vmem:[%s2] sm:$0xff]
  %v23 = vld [vmem:[%s4] sm:$0x1]
  %v25 = vlaneseq
  %v26 = vshrl.u32 %v25, 7
  %v27 = vsub.s32 0, %v26
  %v28 = vrot.slane %v23, %v27
  %vm30 = vcmask 64512
  %v32 = vsel %vm30, %v20, 0
  %v35 = vsel %vm30, %v21, 0
  %37 = vmatprep.subr.mxu0 0.0
  %38 = vmatpush1.msra.mxu0 %v22
  %39 = vmatprep.subr.mxu0 0.0
  %40 = vmatpush1.msra.mxu0 0.0
  %41 = vmatprep.subr.mxu0 0.0
  %42 = vmatpush1.msra.mxu0 0.0
  %43 = vmatprep.subr.mxu0 0.0
  %44 = vmatpush1.msra.mxu0 0.0
  %45 = vmatprep.subr.mxu0 0.0
  %46 = vmatpush1.msra.mxu0 0.0
  %47 = vmatprep.subr.mxu0 0.0
  %48 = vmatpush1.msra.mxu0 0.0
  %49 = vmatprep.subr.mxu0 0.0
  %50 = vmatpush1.msra.mxu0 0.0
  %51 = vmatprep.subr.mxu0 0.0
  %52 = vmatpush1.msra.mxu0 0.0
  %53 = vmatprep.subr.mxu0 0.0
  %54 = vmatpush1.msra.mxu0 0.0
  %55 = vmatprep.subr.mxu0 0.0
  %56 = vmatpush1.msra.mxu0 0.0
  %57 = vmatprep.subr.mxu0 0.0
  %58 = vmatpush1.msra.mxu0 0.0
  %59 = vmatprep.subr.mxu0 0.0
  %60 = vmatpush1.msra.mxu0 0.0
  %61 = vmatprep.subr.mxu0 0.0
  %62 = vmatpush1.msra.mxu0 0.0
  %63 = vmatprep.subr.mxu0 0.0
  %64 = vmatpush1.msra.mxu0 0.0
  %65 = vmatprep.subr.mxu0 0.0
  %66 = vmatpush1.msra.mxu0 0.0
  %67 = vmatprep.subr.mxu0 0.0
  %68 = vmatpush1.msra.mxu0 0.0
  %69 = vmatprep.subr.mxu0 0.0
  %70 = vmatpush1.msra.mxu0 0.0
  %71 = vmatprep.subr.mxu0 0.0
  %72 = vmatpush1.msra.mxu0 0.0
  %73 = vmatprep.subr.mxu0 0.0
  %74 = vmatpush1.msra.mxu0 0.0
  %75 = vmatprep.subr.mxu0 0.0
  %76 = vmatpush1.msra.mxu0 0.0
  %77 = vmatprep.subr.mxu0 0.0
  %78 = vmatpush1.msra.mxu0 0.0
  %79 = vmatprep.subr.mxu0 0.0
  %80 = vmatpush1.msra.mxu0 0.0
  %81 = vmatprep.subr.mxu0 0.0
  %82 = vmatpush1.msra.mxu0 0.0
  %83 = vmatprep.subr.mxu0 0.0
  %84 = vmatpush1.msra.mxu0 0.0
  %85 = vmatprep.subr.mxu0 0.0
  %86 = vmatpush1.msra.mxu0 0.0
  %87 = vmatprep.subr.mxu0 0.0
  %88 = vmatpush1.msra.mxu0 0.0
  %89 = vmatprep.subr.mxu0 0.0
  %90 = vmatpush1.msra.mxu0 0.0
  %91 = vmatprep.subr.mxu0 0.0
  %92 = vmatpush1.msra.mxu0 0.0
  %93 = vmatprep.subr.mxu0 0.0
  %94 = vmatpush1.msra.mxu0 0.0
  %95 = vmatprep.subr.mxu0 0.0
  %96 = vmatpush1.msra.mxu0 0.0
  %97 = vmatprep.subr.mxu0 0.0
  %98 = vmatpush1.msra.mxu0 0.0
  %99 = vmatprep.subr.mxu0 0.0
  %100 = vmatpush1.msra.mxu0 0.0
  %101 = vmatprep.mubr.f32.mxu0 0.0
  %102 = vmatmul.mubr.f32.gmra.mrb[0].mxu0 %v32
  %v103 = vpop.f32.mrb[0].mxu0
  %v104 = vadd.f32 %v28, %v103
  %v105 = vpop.f32.mrb[0].mxu0
  %106 = vmatprep.mubr.f32.mxu0 0.0
  %107 = vmatmul.mubr.f32.gmra.mrb[0].mxu0 %v35
  %v108 = vpop.f32.mrb[0].mxu0
  %v109 = vadd.f32 %v28, %v108
  %v110 = vpop.f32.mrb[0].mxu0
  %111 = vdwg.mxu0
  %v112 = vld [vmem:[%s3] sm:$0xff]
  %v113 = vld [vmem:[%s3 + $0x8] sm:$0xff]
  %v114 = vld [vmem:[%s3 + $0x10] sm:$0xff]
  %v115 = vld [vmem:[%s3 + $0x18] sm:$0xff]
  %v116 = vld [vmem:[%s1] sm:$0x3]
  %vm117 = vcmask 261120
  %v119 = vsel %vm117, %v116, 0
  %121 = vmatprep.subr.mxu0 0.0
  %122 = vmatpush1.msra.mxu0 %v112
  %123 = vmatprep.subr.mxu0 0.0
  %124 = vmatpush1.msra.mxu0 %v113
  %125 = vmatprep.subr.mxu0 0.0
  %126 = vmatpush1.msra.mxu0 %v114
  %127 = vmatprep.subr.mxu0 0.0
  %128 = vmatpush1.msra.mxu0 %v115
  %129 = vmatprep.subr.mxu0 0.0
  %130 = vmatpush1.msra.mxu0 0.0
  %131 = vmatprep.subr.mxu0 0.0
  %132 = vmatpush1.msra.mxu0 0.0
  %133 = vmatprep.subr.mxu0 0.0
  %134 = vmatpush1.msra.mxu0 0.0
  %135 = vmatprep.subr.mxu0 0.0
  %136 = vmatpush1.msra.mxu0 0.0
  %137 = vmatprep.subr.mxu0 0.0
  %138 = vmatpush1.msra.mxu0 0.0
  %139 = vmatprep.subr.mxu0 0.0
  %140 = vmatpush1.msra.mxu0 0.0
  %141 = vmatprep.subr.mxu0 0.0
  %142 = vmatpush1.msra.mxu0 0.0
  %143 = vmatprep.subr.mxu0 0.0
  %144 = vmatpush1.msra.mxu0 0.0
  %145 = vmatprep.subr.mxu0 0.0
  %146 = vmatpush1.msra.mxu0 0.0
  %147 = vmatprep.subr.mxu0 0.0
  %148 = vmatpush1.msra.mxu0 0.0
  %149 = vmatprep.subr.mxu0 0.0
  %150 = vmatpush1.msra.mxu0 0.0
  %151 = vmatprep.subr.mxu0 0.0
  %152 = vmatpush1.msra.mxu0 0.0
  %153 = vmatprep.subr.mxu0 0.0
  %154 = vmatpush1.msra.mxu0 0.0
  %155 = vmatprep.subr.mxu0 0.0
  %156 = vmatpush1.msra.mxu0 0.0
  %157 = vmatprep.subr.mxu0 0.0
  %158 = vmatpush1.msra.mxu0 0.0
  %159 = vmatprep.subr.mxu0 0.0
  %160 = vmatpush1.msra.mxu0 0.0
  %161 = vmatprep.subr.mxu0 0.0
  %162 = vmatpush1.msra.mxu0 0.0
  %163 = vmatprep.subr.mxu0 0.0
  %164 = vmatpush1.msra.mxu0 0.0
  %165 = vmatprep.subr.mxu0 0.0
  %166 = vmatpush1.msra.mxu0 0.0
  %167 = vmatprep.subr.mxu0 0.0
  %168 = vmatpush1.msra.mxu0 0.0
  %169 = vmatprep.subr.mxu0 0.0
  %170 = vmatpush1.msra.mxu0 0.0
  %171 = vmatprep.subr.mxu0 0.0
  %172 = vmatpush1.msra.mxu0 0.0
  %173 = vmatprep.subr.mxu0 0.0
  %174 = vmatpush1.msra.mxu0 0.0
  %175 = vmatprep.subr.mxu0 0.0
  %176 = vmatpush1.msra.mxu0 0.0
  %177 = vmatprep.subr.mxu0 0.0
  %178 = vmatpush1.msra.mxu0 0.0
  %179 = vmatprep.subr.mxu0 0.0
  %180 = vmatpush1.msra.mxu0 0.0
  %181 = vmatprep.subr.mxu0 0.0
  %182 = vmatpush1.msra.mxu0 0.0
  %183 = vmatprep.subr.mxu0 0.0
  %184 = vmatpush1.msra.mxu0 0.0
  %185 = vmatprep.mubr.f32.mxu0 0.0
  %186 = vmatmul.mubr.f32.gmra.mrb[0].mxu0 %v119
  %v187 = vpop.f32.mrb[0].mxu0
  %v188 = vadd.f32 0.0, %v187
  %v189 = vpop.f32.mrb[0].mxu0
  %190 = vdwg.mxu0
  %v192 = vrot.slane %v188, 1
  %v195 = vadd.f32 %v104, %v188
  %v196 = vadd.f32 %v109, %v192
  %v197 = vtanh.pop %v195
  %v198 = vtanh.pop %v196
  %vm199 = vcmask 253952
  %200 = vst.msk [vmem:[%s5] sm:$0x1] %vm199, %v197
  %201 = vst.msk [vmem:[%s5 + $0x8] sm:$0x1] %vm199, %v198
  %v204 = vrot.slane %v198, 7
  %vm205 = vcmask 1041409
  %v206 = vsel %vm205, %v204, %v197
  %v207 = vsel %vm117, %v206, 0
  %209 = vmatprep.subr.mxu0 0.0
  %210 = vmatpush1.msra.mxu0 %v112
  %211 = vmatprep.subr.mxu0 0.0
  %212 = vmatpush1.msra.mxu0 %v113
  %213 = vmatprep.subr.mxu0 0.0
  %214 = vmatpush1.msra.mxu0 %v114
  %215 = vmatprep.subr.mxu0 0.0
  %216 = vmatpush1.msra.mxu0 %v115
  %217 = vmatprep.subr.mxu0 0.0
  %218 = vmatpush1.msra.mxu0 0.0
  %219 = vmatprep.subr.mxu0 0.0
  %220 = vmatpush1.msra.mxu0 0.0
  %221 = vmatprep.subr.mxu0 0.0
  %222 = vmatpush1.msra.mxu0 0.0
  %223 = vmatprep.subr.mxu0 0.0
  %224 = vmatpush1.msra.mxu0 0.0
  %225 = vmatprep.subr.mxu0 0.0
  %226 = vmatpush1.msra.mxu0 0.0
  %227 = vmatprep.subr.mxu0 0.0
  %228 = vmatpush1.msra.mxu0 0.0
  %229 = vmatprep.subr.mxu0 0.0
  %230 = vmatpush1.msra.mxu0 0.0
  %231 = vmatprep.subr.mxu0 0.0
  %232 = vmatpush1.msra.mxu0 0.0
  %233 = vmatprep.subr.mxu0 0.0
  %234 = vmatpush1.msra.mxu0 0.0
  %235 = vmatprep.subr.mxu0 0.0
  %236 = vmatpush1.msra.mxu0 0.0
  %237 = vmatprep.subr.mxu0 0.0
  %238 = vmatpush1.msra.mxu0 0.0
  %239 = vmatprep.subr.mxu0 0.0
  %240 = vmatpush1.msra.mxu0 0.0
  %241 = vmatprep.subr.mxu0 0.0
  %242 = vmatpush1.msra.mxu0 0.0
  %243 = vmatprep.subr.mxu0 0.0
  %244 = vmatpush1.msra.mxu0 0.0
  %245 = vmatprep.subr.mxu0 0.0
  %246 = vmatpush1.msra.mxu0 0.0
  %247 = vmatprep.subr.mxu0 0.0
  %248 = vmatpush1.msra.mxu0 0.0
  %249 = vmatprep.subr.mxu0 0.0
  %250 = vmatpush1.msra.mxu0 0.0
  %251 = vmatprep.subr.mxu0 0.0
  %252 = vmatpush1.msra.mxu0 0.0
  %253 = vmatprep.subr.mxu0 0.0
  %254 = vmatpush1.msra.mxu0 0.0
  %255 = vmatprep.subr.mxu0 0.0
  %256 = vmatpush1.msra.mxu0 0.0
  %257 = vmatprep.subr.mxu0 0.0
  %258 = vmatpush1.msra.mxu0 0.0
  %259 = vmatprep.subr.mxu0 0.0
  %260 = vmatpush1.msra.mxu0 0.0
  %261 = vmatprep.subr.mxu0 0.0
  %262 = vmatpush1.msra.mxu0 0.0
  %263 = vmatprep.subr.mxu0 0.0
  %264 = vmatpush1.msra.mxu0 0.0
  %265 = vmatprep.subr.mxu0 0.0
  %266 = vmatpush1.msra.mxu0 0.0
  %267 = vmatprep.subr.mxu0 0.0
  %268 = vmatpush1.msra.mxu0 0.0
  %269 = vmatprep.subr.mxu0 0.0
  %270 = vmatpush1.msra.mxu0 0.0
  %271 = vmatprep.subr.mxu0 0.0
  %272 = vmatpush1.msra.mxu0 0.0
  %273 = vmatprep.mubr.f32.mxu0 0.0
  %274 = vmatmul.mubr.f32.gmra.mrb[0].mxu0 %v207
  %v275 = vpop.f32.mrb[0].mxu0
  %v276 = vadd.f32 0.0, %v275
  %v277 = vpop.f32.mrb[0].mxu0
  %278 = vdwg.mxu0
  %v280 = vrot.slane %v276, 7
  %v283 = vadd.f32 %v104, %v280
  %v284 = vadd.f32 %v109, %v276
  %v285 = vtanh.pop %v283
  %v286 = vtanh.pop %v284
  %vm287 = vcmask 254977
  %288 = vst.msk [vmem:[%s5] sm:$0x2] %vm287, %v285
  %289 = vst.msk [vmem:[%s5 + $0x8] sm:$0x2] %vm287, %v286
  %v292 = vrot.slane %v285, 1
  %v293 = vsel %vm205, %v286, %v292
  %v294 = vsel %vm117, %v293, 0
  %296 = vmatprep.subr.mxu0 0.0
  %297 = vmatpush1.msra.mxu0 %v112
  %298 = vmatprep.subr.mxu0 0.0
  %299 = vmatpush1.msra.mxu0 %v113
  %300 = vmatprep.subr.mxu0 0.0
  %301 = vmatpush1.msra.mxu0 %v114
  %302 = vmatprep.subr.mxu0 0.0
  %303 = vmatpush1.msra.mxu0 %v115
  %304 = vmatprep.subr.mxu0 0.0
  %305 = vmatpush1.msra.mxu0 0.0
  %306 = vmatprep.subr.mxu0 0.0
  %307 = vmatpush1.msra.mxu0 0.0
  %308 = vmatprep.subr.mxu0 0.0
  %309 = vmatpush1.msra.mxu0 0.0
  %310 = vmatprep.subr.mxu0 0.0
  %311 = vmatpush1.msra.mxu0 0.0
  %312 = vmatprep.subr.mxu0 0.0
  %313 = vmatpush1.msra.mxu0 0.0
  %314 = vmatprep.subr.mxu0 0.0
  %315 = vmatpush1.msra.mxu0 0.0
  %316 = vmatprep.subr.mxu0 0.0
  %317 = vmatpush1.msra.mxu0 0.0
  %318 = vmatprep.subr.mxu0 0.0
  %319 = vmatpush1.msra.mxu0 0.0
  %320 = vmatprep.subr.mxu0 0.0
  %321 = vmatpush1.msra.mxu0 0.0
  %322 = vmatprep.subr.mxu0 0.0
  %323 = vmatpush1.msra.mxu0 0.0
  %324 = vmatprep.subr.mxu0 0.0
  %325 = vmatpush1.msra.mxu0 0.0
  %326 = vmatprep.subr.mxu0 0.0
  %327 = vmatpush1.msra.mxu0 0.0
  %328 = vmatprep.subr.mxu0 0.0
  %329 = vmatpush1.msra.mxu0 0.0
  %330 = vmatprep.subr.mxu0 0.0
  %331 = vmatpush1.msra.mxu0 0.0
  %332 = vmatprep.subr.mxu0 0.0
  %333 = vmatpush1.msra.mxu0 0.0
  %334 = vmatprep.subr.mxu0 0.0
  %335 = vmatpush1.msra.mxu0 0.0
  %336 = vmatprep.subr.mxu0 0.0
  %337 = vmatpush1.msra.mxu0 0.0
  %338 = vmatprep.subr.mxu0 0.0
  %339 = vmatpush1.msra.mxu0 0.0
  %340 = vmatprep.subr.mxu0 0.0
  %341 = vmatpush1.msra.mxu0 0.0
  %342 = vmatprep.subr.mxu0 0.0
  %343 = vmatpush1.msra.mxu0 0.0
  %344 = vmatprep.subr.mxu0 0.0
  %345 = vmatpush1.msra.mxu0 0.0
  %346 = vmatprep.subr.mxu0 0.0
  %347 = vmatpush1.msra.mxu0 0.0
  %348 = vmatprep.subr.mxu0 0.0
  %349 = vmatpush1.msra.mxu0 0.0
  %350 = vmatprep.subr.mxu0 0.0
  %351 = vmatpush1.msra.mxu0 0.0
  %352 = vmatprep.subr.mxu0 0.0
  %353 = vmatpush1.msra.mxu0 0.0
  %354 = vmatprep.subr.mxu0 0.0
  %355 = vmatpush1.msra.mxu0 0.0
  %356 = vmatprep.subr.mxu0 0.0
  %357 = vmatpush1.msra.mxu0 0.0
  %358 = vmatprep.subr.mxu0 0.0
  %359 = vmatpush1.msra.mxu0 0.0
  %360 = vmatprep.mubr.f32.mxu0 0.0
  %361 = vmatmul.mubr.f32.gmra.mrb[0].mxu0 %v294
  %v362 = vpop.f32.mrb[0].mxu0
  %v363 = vadd.f32 0.0, %v362
  %v364 = vpop.f32.mrb[0].mxu0
  %365 = vdwg.mxu0
  %v367 = vrot.slane %v363, 6
  %v368 = vrot.slane %v363, 7
  %v371 = vadd.f32 %v104, %v367
  %v372 = vadd.f32 %v109, %v368
  %v373 = vtanh.pop %v371
  %v374 = vtanh.pop %v372
  %vm375 = vcmask 256002
  %376 = vst.msk [vmem:[%s5] sm:$0x4] %vm375, %v373
  %377 = vst.msk [vmem:[%s5 + $0x8] sm:$0x4] %vm375, %v374
  %v380 = vrot.slane %v373, 2
  %v381 = vrot.slane %v374, 1
  %v382 = vsel %vm205, %v381, %v380
  %v383 = vsel %vm117, %v382, 0
  %385 = vmatprep.subr.mxu0 0.0
  %386 = vmatpush1.msra.mxu0 %v112
  %387 = vmatprep.subr.mxu0 0.0
  %388 = vmatpush1.msra.mxu0 %v113
  %389 = vmatprep.subr.mxu0 0.0
  %390 = vmatpush1.msra.mxu0 %v114
  %391 = vmatprep.subr.mxu0 0.0
  %392 = vmatpush1.msra.mxu0 %v115
  %393 = vmatprep.subr.mxu0 0.0
  %394 = vmatpush1.msra.mxu0 0.0
  %395 = vmatprep.subr.mxu0 0.0
  %396 = vmatpush1.msra.mxu0 0.0
  %397 = vmatprep.subr.mxu0 0.0
  %398 = vmatpush1.msra.mxu0 0.0
  %399 = vmatprep.subr.mxu0 0.0
  %400 = vmatpush1.msra.mxu0 0.0
  %401 = vmatprep.subr.mxu0 0.0
  %402 = vmatpush1.msra.mxu0 0.0
  %403 = vmatprep.subr.mxu0 0.0
  %404 = vmatpush1.msra.mxu0 0.0
  %405 = vmatprep.subr.mxu0 0.0
  %406 = vmatpush1.msra.mxu0 0.0
  %407 = vmatprep.subr.mxu0 0.0
  %408 = vmatpush1.msra.mxu0 0.0
  %409 = vmatprep.subr.mxu0 0.0
  %410 = vmatpush1.msra.mxu0 0.0
  %411 = vmatprep.subr.mxu0 0.0
  %412 = vmatpush1.msra.mxu0 0.0
  %413 = vmatprep.subr.mxu0 0.0
  %414 = vmatpush1.msra.mxu0 0.0
  %415 = vmatprep.subr.mxu0 0.0
  %416 = vmatpush1.msra.mxu0 0.0
  %417 = vmatprep.subr.mxu0 0.0
  %418 = vmatpush1.msra.mxu0 0.0
  %419 = vmatprep.subr.mxu0 0.0
  %420 = vmatpush1.msra.mxu0 0.0
  %421 = vmatprep.subr.mxu0 0.0
  %422 = vmatpush1.msra.mxu0 0.0
  %423 = vmatprep.subr.mxu0 0.0
  %424 = vmatpush1.msra.mxu0 0.0
  %425 = vmatprep.subr.mxu0 0.0
  %426 = vmatpush1.msra.mxu0 0.0
  %427 = vmatprep.subr.mxu0 0.0
  %428 = vmatpush1.msra.mxu0 0.0
  %429 = vmatprep.subr.mxu0 0.0
  %430 = vmatpush1.msra.mxu0 0.0
  %431 = vmatprep.subr.mxu0 0.0
  %432 = vmatpush1.msra.mxu0 0.0
  %433 = vmatprep.subr.mxu0 0.0
  %434 = vmatpush1.msra.mxu0 0.0
  %435 = vmatprep.subr.mxu0 0.0
  %436 = vmatpush1.msra.mxu0 0.0
  %437 = vmatprep.subr.mxu0 0.0
  %438 = vmatpush1.msra.mxu0 0.0
  %439 = vmatprep.subr.mxu0 0.0
  %440 = vmatpush1.msra.mxu0 0.0
  %441 = vmatprep.subr.mxu0 0.0
  %442 = vmatpush1.msra.mxu0 0.0
  %443 = vmatprep.subr.mxu0 0.0
  %444 = vmatpush1.msra.mxu0 0.0
  %445 = vmatprep.subr.mxu0 0.0
  %446 = vmatpush1.msra.mxu0 0.0
  %447 = vmatprep.subr.mxu0 0.0
  %448 = vmatpush1.msra.mxu0 0.0
  %449 = vmatprep.mubr.f32.mxu0 0.0
  %450 = vmatmul.mubr.f32.gmra.mrb[0].mxu0 %v383
  %v451 = vpop.f32.mrb[0].mxu0
  %v452 = vadd.f32 0.0, %v451
  %v453 = vpop.f32.mrb[0].mxu0
  %454 = vdwg.mxu0
  %v456 = vrot.slane %v452, 5
  %v457 = vrot.slane %v452, 6
  %v460 = vadd.f32 %v104, %v456
  %v461 = vadd.f32 %v109, %v457
  %v462 = vtanh.pop %v460
  %v463 = vtanh.pop %v461
  %vm464 = vcmask 257027
  %465 = vst.msk [vmem:[%s5] sm:$0x8] %vm464, %v462
  %466 = vst.msk [vmem:[%s5 + $0x8] sm:$0x8] %vm464, %v463
  %v469 = vrot.slane %v462, 3
  %v470 = vrot.slane %v463, 2
  %v471 = vsel %vm205, %v470, %v469
  %v472 = vsel %vm117, %v471, 0
  %474 = vmatprep.subr.mxu0 0.0
  %475 = vmatpush1.msra.mxu0 %v112
  %476 = vmatprep.subr.mxu0 0.0
  %477 = vmatpush1.msra.mxu0 %v113
  %478 = vmatprep.subr.mxu0 0.0
  %479 = vmatpush1.msra.mxu0 %v114
  %480 = vmatprep.subr.mxu0 0.0
  %481 = vmatpush1.msra.mxu0 %v115
  %482 = vmatprep.subr.mxu0 0.0
  %483 = vmatpush1.msra.mxu0 0.0
  %484 = vmatprep.subr.mxu0 0.0
  %485 = vmatpush1.msra.mxu0 0.0
  %486 = vmatprep.subr.mxu0 0.0
  %487 = vmatpush1.msra.mxu0 0.0
  %488 = vmatprep.subr.mxu0 0.0
  %489 = vmatpush1.msra.mxu0 0.0
  %490 = vmatprep.subr.mxu0 0.0
  %491 = vmatpush1.msra.mxu0 0.0
  %492 = vmatprep.subr.mxu0 0.0
  %493 = vmatpush1.msra.mxu0 0.0
  %494 = vmatprep.subr.mxu0 0.0
  %495 = vmatpush1.msra.mxu0 0.0
  %496 = vmatprep.subr.mxu0 0.0
  %497 = vmatpush1.msra.mxu0 0.0
  %498 = vmatprep.subr.mxu0 0.0
  %499 = vmatpush1.msra.mxu0 0.0
  %500 = vmatprep.subr.mxu0 0.0
  %501 = vmatpush1.msra.mxu0 0.0
  %502 = vmatprep.subr.mxu0 0.0
  %503 = vmatpush1.msra.mxu0 0.0
  %504 = vmatprep.subr.mxu0 0.0
  %505 = vmatpush1.msra.mxu0 0.0
  %506 = vmatprep.subr.mxu0 0.0
  %507 = vmatpush1.msra.mxu0 0.0
  %508 = vmatprep.subr.mxu0 0.0
  %509 = vmatpush1.msra.mxu0 0.0
  %510 = vmatprep.subr.mxu0 0.0
  %511 = vmatpush1.msra.mxu0 0.0
  %512 = vmatprep.subr.mxu0 0.0
  %513 = vmatpush1.msra.mxu0 0.0
  %514 = vmatprep.subr.mxu0 0.0
  %515 = vmatpush1.msra.mxu0 0.0
  %516 = vmatprep.subr.mxu0 0.0
  %517 = vmatpush1.msra.mxu0 0.0
  %518 = vmatprep.subr.mxu0 0.0
  %519 = vmatpush1.msra.mxu0 0.0
  %520 = vmatprep.subr.mxu0 0.0
  %521 = vmatpush1.msra.mxu0 0.0
  %522 = vmatprep.subr.mxu0 0.0
  %523 = vmatpush1.msra.mxu0 0.0
  %524 = vmatprep.subr.mxu0 0.0
  %525 = vmatpush1.msra.mxu0 0.0
  %526 = vmatprep.subr.mxu0 0.0
  %527 = vmatpush1.msra.mxu0 0.0
  %528 = vmatprep.subr.mxu0 0.0
  %529 = vmatpush1.msra.mxu0 0.0
  %530 = vmatprep.subr.mxu0 0.0
  %531 = vmatpush1.msra.mxu0 0.0
  %532 = vmatprep.subr.mxu0 0.0
  %533 = vmatpush1.msra.mxu0 0.0
  %534 = vmatprep.subr.mxu0 0.0
  %535 = vmatpush1.msra.mxu0 0.0
  %536 = vmatprep.subr.mxu0 0.0
  %537 = vmatpush1.msra.mxu0 0.0
  %538 = vmatprep.mubr.f32.mxu0 0.0
  %539 = vmatmul.mubr.f32.gmra.mrb[0].mxu0 %v472
  %v540 = vpop.f32.mrb[0].mxu0
  %v541 = vadd.f32 0.0, %v540
  %v542 = vpop.f32.mrb[0].mxu0
  %543 = vdwg.mxu0
  %v545 = vrot.slane %v541, 4
  %v546 = vrot.slane %v541, 5
  %v549 = vadd.f32 %v104, %v545
  %v550 = vadd.f32 %v109, %v546
  %v551 = vtanh.pop %v549
  %v552 = vtanh.pop %v550
  %vm553 = vcmask 258052
  %554 = vst.msk [vmem:[%s5] sm:$0x10] %vm553, %v551
  %555 = vst.msk [vmem:[%s5 + $0x8] sm:$0x10] %vm553, %v552
  %v558 = vrot.slane %v551, 4
  %v559 = vrot.slane %v552, 3
  %v560 = vsel %vm205, %v559, %v558
  %v561 = vsel %vm117, %v560, 0
  %563 = vmatprep.subr.mxu0 0.0
  %564 = vmatpush1.msra.mxu0 %v112
  %565 = vmatprep.subr.mxu0 0.0
  %566 = vmatpush1.msra.mxu0 %v113
  %567 = vmatprep.subr.mxu0 0.0
  %568 = vmatpush1.msra.mxu0 %v114
  %569 = vmatprep.subr.mxu0 0.0
  %570 = vmatpush1.msra.mxu0 %v115
  %571 = vmatprep.subr.mxu0 0.0
  %572 = vmatpush1.msra.mxu0 0.0
  %573 = vmatprep.subr.mxu0 0.0
  %574 = vmatpush1.msra.mxu0 0.0
  %575 = vmatprep.subr.mxu0 0.0
  %576 = vmatpush1.msra.mxu0 0.0
  %577 = vmatprep.subr.mxu0 0.0
  %578 = vmatpush1.msra.mxu0 0.0
  %579 = vmatprep.subr.mxu0 0.0
  %580 = vmatpush1.msra.mxu0 0.0
  %581 = vmatprep.subr.mxu0 0.0
  %582 = vmatpush1.msra.mxu0 0.0
  %583 = vmatprep.subr.mxu0 0.0
  %584 = vmatpush1.msra.mxu0 0.0
  %585 = vmatprep.subr.mxu0 0.0
  %586 = vmatpush1.msra.mxu0 0.0
  %587 = vmatprep.subr.mxu0 0.0
  %588 = vmatpush1.msra.mxu0 0.0
  %589 = vmatprep.subr.mxu0 0.0
  %590 = vmatpush1.msra.mxu0 0.0
  %591 = vmatprep.subr.mxu0 0.0
  %592 = vmatpush1.msra.mxu0 0.0
  %593 = vmatprep.subr.mxu0 0.0
  %594 = vmatpush1.msra.mxu0 0.0
  %595 = vmatprep.subr.mxu0 0.0
  %596 = vmatpush1.msra.mxu0 0.0
  %597 = vmatprep.subr.mxu0 0.0
  %598 = vmatpush1.msra.mxu0 0.0
  %599 = vmatprep.subr.mxu0 0.0
  %600 = vmatpush1.msra.mxu0 0.0
  %601 = vmatprep.subr.mxu0 0.0
  %602 = vmatpush1.msra.mxu0 0.0
  %603 = vmatprep.subr.mxu0 0.0
  %604 = vmatpush1.msra.mxu0 0.0
  %605 = vmatprep.subr.mxu0 0.0
  %606 = vmatpush1.msra.mxu0 0.0
  %607 = vmatprep.subr.mxu0 0.0
  %608 = vmatpush1.msra.mxu0 0.0
  %609 = vmatprep.subr.mxu0 0.0
  %610 = vmatpush1.msra.mxu0 0.0
  %611 = vmatprep.subr.mxu0 0.0
  %612 = vmatpush1.msra.mxu0 0.0
  %613 = vmatprep.subr.mxu0 0.0
  %614 = vmatpush1.msra.mxu0 0.0
  %615 = vmatprep.subr.mxu0 0.0
  %616 = vmatpush1.msra.mxu0 0.0
  %617 = vmatprep.subr.mxu0 0.0
  %618 = vmatpush1.msra.mxu0 0.0
  %619 = vmatprep.subr.mxu0 0.0
  %620 = vmatpush1.msra.mxu0 0.0
  %621 = vmatprep.subr.mxu0 0.0
  %622 = vmatpush1.msra.mxu0 0.0
  %623 = vmatprep.subr.mxu0 0.0
  %624 = vmatpush1.msra.mxu0 0.0
  %625 = vmatprep.subr.mxu0 0.0
  %626 = vmatpush1.msra.mxu0 0.0
  %627 = vmatprep.mubr.f32.mxu0 0.0
  %628 = vmatmul.mubr.f32.gmra.mrb[0].mxu0 %v561
  %v629 = vpop.f32.mrb[0].mxu0
  %v630 = vadd.f32 0.0, %v629
  %v631 = vpop.f32.mrb[0].mxu0
  %632 = vdwg.mxu0
  %v634 = vrot.slane %v630, 3
  %v635 = vrot.slane %v630, 4
  %v638 = vadd.f32 %v104, %v634
  %v639 = vadd.f32 %v109, %v635
  %v640 = vtanh.pop %v638
  %v641 = vtanh.pop %v639
  %vm642 = vcmask 259077
  %643 = vst.msk [vmem:[%s5] sm:$0x20] %vm642, %v640
  %644 = vst.msk [vmem:[%s5 + $0x8] sm:$0x20] %vm642, %v641
  %v647 = vrot.slane %v640, 5
  %v648 = vrot.slane %v641, 4
  %v649 = vsel %vm205, %v648, %v647
  %v650 = vsel %vm117, %v649, 0
  %652 = vmatprep.subr.mxu0 0.0
  %653 = vmatpush1.msra.mxu0 %v112
  %654 = vmatprep.subr.mxu0 0.0
  %655 = vmatpush1.msra.mxu0 %v113
  %656 = vmatprep.subr.mxu0 0.0
  %657 = vmatpush1.msra.mxu0 %v114
  %658 = vmatprep.subr.mxu0 0.0
  %659 = vmatpush1.msra.mxu0 %v115
  %660 = vmatprep.subr.mxu0 0.0
  %661 = vmatpush1.msra.mxu0 0.0
  %662 = vmatprep.subr.mxu0 0.0
  %663 = vmatpush1.msra.mxu0 0.0
  %664 = vmatprep.subr.mxu0 0.0
  %665 = vmatpush1.msra.mxu0 0.0
  %666 = vmatprep.subr.mxu0 0.0
  %667 = vmatpush1.msra.mxu0 0.0
  %668 = vmatprep.subr.mxu0 0.0
  %669 = vmatpush1.msra.mxu0 0.0
  %670 = vmatprep.subr.mxu0 0.0
  %671 = vmatpush1.msra.mxu0 0.0
  %672 = vmatprep.subr.mxu0 0.0
  %673 = vmatpush1.msra.mxu0 0.0
  %674 = vmatprep.subr.mxu0 0.0
  %675 = vmatpush1.msra.mxu0 0.0
  %676 = vmatprep.subr.mxu0 0.0
  %677 = vmatpush1.msra.mxu0 0.0
  %678 = vmatprep.subr.mxu0 0.0
  %679 = vmatpush1.msra.mxu0 0.0
  %680 = vmatprep.subr.mxu0 0.0
  %681 = vmatpush1.msra.mxu0 0.0
  %682 = vmatprep.subr.mxu0 0.0
  %683 = vmatpush1.msra.mxu0 0.0
  %684 = vmatprep.subr.mxu0 0.0
  %685 = vmatpush1.msra.mxu0 0.0
  %686 = vmatprep.subr.mxu0 0.0
  %687 = vmatpush1.msra.mxu0 0.0
  %688 = vmatprep.subr.mxu0 0.0
  %689 = vmatpush1.msra.mxu0 0.0
  %690 = vmatprep.subr.mxu0 0.0
  %691 = vmatpush1.msra.mxu0 0.0
  %692 = vmatprep.subr.mxu0 0.0
  %693 = vmatpush1.msra.mxu0 0.0
  %694 = vmatprep.subr.mxu0 0.0
  %695 = vmatpush1.msra.mxu0 0.0
  %696 = vmatprep.subr.mxu0 0.0
  %697 = vmatpush1.msra.mxu0 0.0
  %698 = vmatprep.subr.mxu0 0.0
  %699 = vmatpush1.msra.mxu0 0.0
  %700 = vmatprep.subr.mxu0 0.0
  %701 = vmatpush1.msra.mxu0 0.0
  %702 = vmatprep.subr.mxu0 0.0
  %703 = vmatpush1.msra.mxu0 0.0
  %704 = vmatprep.subr.mxu0 0.0
  %705 = vmatpush1.msra.mxu0 0.0
  %706 = vmatprep.subr.mxu0 0.0
  %707 = vmatpush1.msra.mxu0 0.0
  %708 = vmatprep.subr.mxu0 0.0
  %709 = vmatpush1.msra.mxu0 0.0
  %710 = vmatprep.subr.mxu0 0.0
  %711 = vmatpush1.msra.mxu0 0.0
  %712 = vmatprep.subr.mxu0 0.0
  %713 = vmatpush1.msra.mxu0 0.0
  %714 = vmatprep.subr.mxu0 0.0
  %715 = vmatpush1.msra.mxu0 0.0
  %716 = vmatprep.mubr.f32.mxu0 0.0
  %717 = vmatmul.mubr.f32.gmra.mrb[0].mxu0 %v650
  %v718 = vpop.f32.mrb[0].mxu0
  %v719 = vadd.f32 0.0, %v718
  %v720 = vpop.f32.mrb[0].mxu0
  %721 = vdwg.mxu0
  %v723 = vrot.slane %v719, 2
  %v724 = vrot.slane %v719, 3
  %v727 = vadd.f32 %v104, %v723
  %v728 = vadd.f32 %v109, %v724
  %v729 = vtanh.pop %v727
  %v730 = vtanh.pop %v728
  %vm731 = vcmask 260102
  %732 = vst.msk [vmem:[%s5] sm:$0x40] %vm731, %v729
  %733 = vst.msk [vmem:[%s5 + $0x8] sm:$0x40] %vm731, %v730
  %v736 = vrot.slane %v729, 6
  %v737 = vrot.slane %v730, 5
  %v738 = vsel %vm205, %v737, %v736
  %v739 = vsel %vm117, %v738, 0
  %741 = vmatprep.subr.mxu0 0.0
  %742 = vmatpush1.msra.mxu0 %v112
  %743 = vmatprep.subr.mxu0 0.0
  %744 = vmatpush1.msra.mxu0 %v113
  %745 = vmatprep.subr.mxu0 0.0
  %746 = vmatpush1.msra.mxu0 %v114
  %747 = vmatprep.subr.mxu0 0.0
  %748 = vmatpush1.msra.mxu0 %v115
  %749 = vmatprep.subr.mxu0 0.0
  %750 = vmatpush1.msra.mxu0 0.0
  %751 = vmatprep.subr.mxu0 0.0
  %752 = vmatpush1.msra.mxu0 0.0
  %753 = vmatprep.subr.mxu0 0.0
  %754 = vmatpush1.msra.mxu0 0.0
  %755 = vmatprep.subr.mxu0 0.0
  %756 = vmatpush1.msra.mxu0 0.0
  %757 = vmatprep.subr.mxu0 0.0
  %758 = vmatpush1.msra.mxu0 0.0
  %759 = vmatprep.subr.mxu0 0.0
  %760 = vmatpush1.msra.mxu0 0.0
  %761 = vmatprep.subr.mxu0 0.0
  %762 = vmatpush1.msra.mxu0 0.0
  %763 = vmatprep.subr.mxu0 0.0
  %764 = vmatpush1.msra.mxu0 0.0
  %765 = vmatprep.subr.mxu0 0.0
  %766 = vmatpush1.msra.mxu0 0.0
  %767 = vmatprep.subr.mxu0 0.0
  %768 = vmatpush1.msra.mxu0 0.0
  %769 = vmatprep.subr.mxu0 0.0
  %770 = vmatpush1.msra.mxu0 0.0
  %771 = vmatprep.subr.mxu0 0.0
  %772 = vmatpush1.msra.mxu0 0.0
  %773 = vmatprep.subr.mxu0 0.0
  %774 = vmatpush1.msra.mxu0 0.0
  %775 = vmatprep.subr.mxu0 0.0
  %776 = vmatpush1.msra.mxu0 0.0
  %777 = vmatprep.subr.mxu0 0.0
  %778 = vmatpush1.msra.mxu0 0.0
  %779 = vmatprep.subr.mxu0 0.0
  %780 = vmatpush1.msra.mxu0 0.0
  %781 = vmatprep.subr.mxu0 0.0
  %782 = vmatpush1.msra.mxu0 0.0
  %783 = vmatprep.subr.mxu0 0.0
  %784 = vmatpush1.msra.mxu0 0.0
  %785 = vmatprep.subr.mxu0 0.0
  %786 = vmatpush1.msra.mxu0 0.0
  %787 = vmatprep.subr.mxu0 0.0
  %788 = vmatpush1.msra.mxu0 0.0
  %789 = vmatprep.subr.mxu0 0.0
  %790 = vmatpush1.msra.mxu0 0.0
  %791 = vmatprep.subr.mxu0 0.0
  %792 = vmatpush1.msra.mxu0 0.0
  %793 = vmatprep.subr.mxu0 0.0
  %794 = vmatpush1.msra.mxu0 0.0
  %795 = vmatprep.subr.mxu0 0.0
  %796 = vmatpush1.msra.mxu0 0.0
  %797 = vmatprep.subr.mxu0 0.0
  %798 = vmatpush1.msra.mxu0 0.0
  %799 = vmatprep.subr.mxu0 0.0
  %800 = vmatpush1.msra.mxu0 0.0
  %801 = vmatprep.subr.mxu0 0.0
  %802 = vmatpush1.msra.mxu0 0.0
  %803 = vmatprep.subr.mxu0 0.0
  %804 = vmatpush1.msra.mxu0 0.0
  %805 = vmatprep.mubr.f32.mxu0 0.0
  %806 = vmatmul.mubr.f32.gmra.mrb[0].mxu0 %v739
  %v807 = vpop.f32.mrb[0].mxu0
  %v808 = vadd.f32 0.0, %v807
  %v809 = vpop.f32.mrb[0].mxu0
  %810 = vdwg.mxu0
  %v812 = vrot.slane %v808, 1
  %v813 = vrot.slane %v808, 2
  %v816 = vadd.f32 %v104, %v812
  %v817 = vadd.f32 %v109, %v813
  %v818 = vtanh.pop %v816
  %v819 = vtanh.pop %v817
  %vm820 = vcmask 261127
  %821 = vst.msk [vmem:[%s5] sm:$0x80] %vm820, %v818
  %822 = vst.msk [vmem:[%s5 + $0x8] sm:$0x80] %vm820, %v819
  // Predicated region
  $region22: #{controller_forward.1} parent=0 // pred_check
    _
  $region23: #{controller_forward.1} parent=0 // pred_check_branch
    %824 = sbr.rel (0) target = $region25
  $region24: #{controller_forward.1} parent=0 // pred_region
    _
  $region25: #{controller_forward.1} parent=0 // pred_fallthru
    _
  // Predicated region
  $region26: #{controller_forward.1} parent=0 // pred_check
    _
  $region27: #{controller_forward.1} parent=0 // pred_check_branch
    %826 = sbr.rel (0) target = $region29
  $region28: #{controller_forward.1} parent=0 // pred_region
    _
  $region29: #{controller_forward.1} parent=0 // pred_fallthru
    _

</llo_original>
